<compile_context>
chip_gen: v7x
topology: tpu7x:2x2x1
jax: 0.10.0
libtpu: 0.0.40
codegen_flags: <defaults>
</compile_context>

<pallas_src>
import functools

import jax
import jax.numpy as jnp
from jax.experimental import pallas as pl
from jax.experimental.pallas import tpu as pltpu

LANE = 128
LN_EPS = 1e-5
VMEM_LIMIT = 32 * 1024 * 1024           # scoped VMEM limit handed to Mosaic
VMEM_BUDGET = 24 * 1024 * 1024          # target for our own buffered bytes
T_RESIDENT_BUDGET = 8 * 1024 * 1024     # max (double-buffered) bytes for resident T


def _round_up(x, m):
    return (x + m - 1) // m * m


# ------------------------------ tiling plan ------------------------------------

def padded_num_nodes(n):
    """Pad granularity for the node dim: 128 for tiny graphs, else 256.
    Kept small (NOT coupled to tile sizes) because A bytes scale with n_pad**2
    and the aggregation stages are A-bandwidth bound."""
    return 128 if n <= 128 else _round_up(n, 256)


def select_tiles(n_pad):
    """Pick (tm, tk) for streaming A_hat in (tm, tk) bf16 blocks.

    tm: row tile, as large as possible while keeping >= 2 row tiles when n_pad
        allows it (so the 'parallel' axis shards across both v7x TCs).
    tk: reduction tile, up to 2048 so one A block is 1-2 MiB and per-grid-step
        overhead is small relative to the block DMA.
    """
    tm = 512
    while tm > 128 and (n_pad % tm != 0 or n_pad // tm < 2):
        tm //= 2
    tk = 2048
    while tk > 128 and n_pad % tk != 0:
        tk //= 2
    return tm, tk


def plan_stage23(n_pad, h_pad, o_pad):
    """Tile sizes + whether T1/T2 can stay fully VMEM-resident, under budget."""
    tm, tk = select_tiles(n_pad)
    t_resident = 2 * (n_pad * h_pad * 2) <= T_RESIDENT_BUDGET

    def vmem_bytes(tm_, tk_):
        a = 2 * tm_ * tk_ * 2                                    # A, dbl-buffered bf16
        t = (2 * n_pad * h_pad * 2) if t_resident else (2 * tk_ * h_pad * 2)
        w = 2 * h_pad * max(h_pad, o_pad) * 2                    # resident weight block
        o = 2 * tm_ * max(h_pad, o_pad) * 4                      # output block (worst case f32)
        acc = tm_ * h_pad * 4                                    # f32 accumulator scratch
        return a + t + w + o + acc

    while vmem_bytes(tm, tk) > VMEM_BUDGET and tk > 256:
        tk //= 2
    while vmem_bytes(tm, tk) > VMEM_BUDGET and tm > 128:
        tm //= 2
    return tm, tk, t_resident


# ----------------------------- in-kernel helpers -------------------------------

def _masked_layernorm(h, gamma, beta, h_true):
    """PyTorch LayerNorm (biased variance, eps inside rsqrt) over the first
    `h_true` lanes of a lane-padded (TM, H_pad) f32 tile. Padded lanes -> 0."""
    lane = jax.lax.broadcasted_iota(jnp.int32, h.shape, dimension=1)
    mask = (lane < h_true).astype(h.dtype)
    inv_h = 1.0 / float(h_true)
    mu = jnp.sum(h * mask, axis=-1, keepdims=True) * inv_h
    centered = (h - mu) * mask
    var = jnp.sum(centered * centered, axis=-1, keepdims=True) * inv_h
    return centered * jax.lax.rsqrt(var + LN_EPS) * gamma + beta


def _t_block(t_ref, tk, t_resident):
    """Current (tk, h_pad) slice of the contraction operand.

    When T is VMEM-resident (block = full (n_pad, h_pad), index_map constant)
    we slice it per K step; when streamed, the ref already IS the K-th block.
    """
    if t_resident:
        off = pl.multiple_of(pl.program_id(1) * tk, tk)
        return t_ref[pl.ds(off, tk), :]
    return t_ref[...]


# --------------------------------- kernels -------------------------------------

def transform_kernel(x_ref, w_ref, t_ref):
    # T1 = X @ W1   (bf16 operands, f32 MXU accumulation)
    t = jnp.dot(x_ref[...], w_ref[...], preferred_element_type=jnp.float32)
    t_ref[...] = t.astype(t_ref.dtype)


def agg1_kernel(a_ref, t_ref, b_ref, gamma_ref, beta_ref, w2_ref,
                out_ref, acc_ref, *, h_true, tk, t_resident):
    # T2 = ReLU(LN(A @ T1 + b1)) @ W2   (accumulate over K tiles of A)
    k = pl.program_id(1)

    @pl.when(k == 0)
    def _():
        acc_ref[...] = jnp.zeros_like(acc_ref)

    acc_ref[...] += jnp.dot(a_ref[...], _t_block(t_ref, tk, t_resident),
                            preferred_element_type=jnp.float32)

    @pl.when(k == pl.num_programs(1) - 1)
    def _():
        h = acc_ref[...] + b_ref[...]                                 # f32
        h = _masked_layernorm(h, gamma_ref[...], beta_ref[...], h_true)
        h = jnp.maximum(h, 0.0)                                       # ReLU
        # dropout: identity (eval mode)
        t2 = jnp.dot(h.astype(w2_ref.dtype), w2_ref[...],
                     preferred_element_type=jnp.float32)
        out_ref[...] = t2.astype(out_ref.dtype)


def agg2_kernel(a_ref, t_ref, b_ref, gamma_ref, beta_ref, wf_ref, bf_ref,
                out_ref, acc_ref, *, h_true, tk, t_resident):
    # out = LN(A @ T2 + b2) @ Wf + bf
    k = pl.program_id(1)

    @pl.when(k == 0)
    def _():
        acc_ref[...] = jnp.zeros_like(acc_ref)

    acc_ref[...] += jnp.dot(a_ref[...], _t_block(t_ref, tk, t_resident),
                            preferred_element_type=jnp.float32)

    @pl.when(k == pl.num_programs(1) - 1)
    def _():
        h = acc_ref[...] + b_ref[...]
        h = _masked_layernorm(h, gamma_ref[...], beta_ref[...], h_true)
        out = jnp.dot(h.astype(wf_ref.dtype), wf_ref[...],
                      preferred_element_type=jnp.float32) + bf_ref[...]
        out_ref[...] = out.astype(out_ref.dtype)


# --------------------------------- wrapper -------------------------------------

def gcn_forward(a_hat_p, x, params, num_nodes):
    """Run the GCNModel forward.

    a_hat_p : (n_pad, n_pad) bf16 normalized adjacency, already padded (built
              once by build_normalized_adjacency -> no per-call N^2 re-pad).
    x       : (num_nodes, in_channels) f32 node features.
    params  : dict of f32 parameters.
    """
    n_pad = a_hat_p.shape[0]
    n, c = x.shape
    hidden = params["w1"].shape[1]
    out_c = params["wf"].shape[1]

    c_pad = _round_up(c, LANE)
    h_pad = _round_up(hidden, LANE)
    o_pad = _round_up(out_c, LANE)

    tm, tk, t_resident = plan_stage23(n_pad, h_pad, o_pad)
    grid_rows = n_pad // tm
    grid_k = n_pad // tk

    f32, bf16 = jnp.float32, jnp.bfloat16

    def pad2(a, rows, cols, dtype):
        return jnp.zeros((rows, cols), dtype).at[
            : a.shape[0], : a.shape[1]].set(a.astype(dtype))

    # Feature / weight padding is O(N*C) or O(C^2) -- negligible vs the A stream.
    x_p = pad2(x, n_pad, c_pad, bf16)
    w1_p = pad2(params["w1"], c_pad, h_pad, bf16)
    w2_p = pad2(params["w2"], h_pad, h_pad, bf16)
    wf_p = pad2(params["wf"], h_pad, o_pad, bf16)
    b1_p = pad2(params["b1"], 1, h_pad, f32)
    b2_p = pad2(params["b2"], 1, h_pad, f32)
    gamma_p = pad2(params["gamma"], 1, h_pad, f32)   # padded lanes -> 0
    beta_p = pad2(params["beta"], 1, h_pad, f32)
    bf_p = pad2(params["bf"], 1, o_pad, f32)

    cparams_1d = pltpu.CompilerParams(
        dimension_semantics=("parallel",), vmem_limit_bytes=VMEM_LIMIT)
    cparams_2d = pltpu.CompilerParams(
        dimension_semantics=("parallel", "arbitrary"),
        vmem_limit_bytes=VMEM_LIMIT)

    # T operand spec: VMEM-resident (constant block index -> DMA'd once, no
    # re-reads per row tile) when it fits, else streamed per K step.
    if t_resident:
        t_spec = pl.BlockSpec((n_pad, h_pad), lambda i, k: (0, 0))
        t_rereads = 1
    else:
        t_spec = pl.BlockSpec((tk, h_pad), lambda i, k: (k, 0))
        t_rereads = grid_rows

    # --- stage 1: T1 = X @ W1 (hoisted feature transform, row-tiled) ---
    t1 = pl.pallas_call(
        transform_kernel,
        out_shape=jax.ShapeDtypeStruct((n_pad, h_pad), bf16),
        grid=(grid_rows,),
        in_specs=[pl.BlockSpec((tm, c_pad), lambda i: (i, 0)),
                  pl.BlockSpec((c_pad, h_pad), lambda i: (0, 0))],
        out_specs=pl.BlockSpec((tm, h_pad), lambda i: (i, 0)),
        compiler_params=cparams_1d,
        cost_estimate=pl.CostEstimate(
            flops=2 * n_pad * c_pad * h_pad,
            transcendentals=0,
            bytes_accessed=2 * (n_pad * c_pad + c_pad * h_pad + n_pad * h_pad)),
    )(x_p, w1_p)

    # --- stage 2: T2 = ReLU(LN(A @ T1 + b1)) @ W2 ---
    t2 = pl.pallas_call(
        functools.partial(agg1_kernel, h_true=hidden, tk=tk,
                          t_resident=t_resident),
        out_shape=jax.ShapeDtypeStruct((n_pad, h_pad), bf16),
        grid=(grid_rows, grid_k),
        in_specs=[pl.BlockSpec((tm, tk), lambda i, k: (i, k)),
                  t_spec,
                  pl.BlockSpec((1, h_pad), lambda i, k: (0, 0)),
                  pl.BlockSpec((1, h_pad), lambda i, k: (0, 0)),
                  pl.BlockSpec((1, h_pad), lambda i, k: (0, 0)),
                  pl.BlockSpec((h_pad, h_pad), lambda i, k: (0, 0))],
        out_specs=pl.BlockSpec((tm, h_pad), lambda i, k: (i, 0)),
        scratch_shapes=[pltpu.VMEM((tm, h_pad), jnp.float32)],
        compiler_params=cparams_2d,
        cost_estimate=pl.CostEstimate(
            flops=2 * n_pad * n_pad * h_pad + 2 * n_pad * h_pad * h_pad,
            transcendentals=n_pad,
            bytes_accessed=2 * (n_pad * n_pad
                                + t_rereads * n_pad * h_pad   # T1 reads
                                + n_pad * h_pad               # T2 write
                                + h_pad * h_pad)),
    )(a_hat_p, t1, b1_p, gamma_p, beta_p, w2_p)

    # --- stage 3: out = LN(A @ T2 + b2) @ Wf + bf (lane-dense 128-wide store) ---
    out_p = pl.pallas_call(
        functools.partial(agg2_kernel, h_true=hidden, tk=tk,
                          t_resident=t_resident),
        out_shape=jax.ShapeDtypeStruct((n_pad, o_pad), jnp.float32),
        grid=(grid_rows, grid_k),
        in_specs=[pl.BlockSpec((tm, tk), lambda i, k: (i, k)),
                  t_spec,
                  pl.BlockSpec((1, h_pad), lambda i, k: (0, 0)),
                  pl.BlockSpec((1, h_pad), lambda i, k: (0, 0)),
                  pl.BlockSpec((1, h_pad), lambda i, k: (0, 0)),
                  pl.BlockSpec((h_pad, o_pad), lambda i, k: (0, 0)),
                  pl.BlockSpec((1, o_pad), lambda i, k: (0, 0))],
        out_specs=pl.BlockSpec((tm, o_pad), lambda i, k: (i, 0)),
        scratch_shapes=[pltpu.VMEM((tm, h_pad), jnp.float32)],
        compiler_params=cparams_2d,
        cost_estimate=pl.CostEstimate(
            flops=2 * n_pad * n_pad * h_pad + 2 * n_pad * h_pad * o_pad,
            transcendentals=n_pad,
            bytes_accessed=2 * (n_pad * n_pad
                                + t_rereads * n_pad * h_pad
                                + h_pad * o_pad)
                           + 4 * n_pad * o_pad),
    )(a_hat_p, t2, b2_p, gamma_p, beta_p, wf_p, bf_p)

    return out_p[:num_nodes, :out_c]


# ------------------------------ plain-JAX glue ----------------------------------

def build_normalized_adjacency(edge_index, num_nodes, n_pad, dtype=jnp.bfloat16):
    """GCNConv normalization, built *directly* at the padded size & kernel dtype
    so the forward never re-pads / re-casts the dense N^2 matrix.
    A_hat[dst, src] = deg(dst)^-1/2 * deg(src)^-1/2 with self-loops added."""
    src, dst = edge_index
    loops = jnp.arange(num_nodes, dtype=src.dtype)
    src = jnp.concatenate([src, loops])
    dst = jnp.concatenate([dst, loops])
    deg = jnp.zeros((num_nodes,), jnp.float32).at[dst].add(1.0)
    dinv = jnp.where(deg > 0, jax.lax.rsqrt(deg), 0.0)
    vals = (dinv[dst] * dinv[src]).astype(dtype)
    return jnp.zeros((n_pad, n_pad), dtype).at[dst, src].add(vals)


def init_params(key, in_channels, hidden_channels, out_channels):
    ks = jax.random.split(key, 3)
    glorot = lambda k, fi, fo: jax.random.uniform(
        k, (fi, fo), jnp.float32,
        -jnp.sqrt(6.0 / (fi + fo)), jnp.sqrt(6.0 / (fi + fo)))
    return {
        "w1": glorot(ks[0], in_channels, hidden_channels),
        "b1": jnp.zeros((1, hidden_channels), jnp.float32),
        "w2": glorot(ks[1], hidden_channels, hidden_channels),
        "b2": jnp.zeros((1, hidden_channels), jnp.float32),
        "gamma": jnp.ones((1, hidden_channels), jnp.float32),
        "beta": jnp.zeros((1, hidden_channels), jnp.float32),
        "wf": glorot(ks[2], hidden_channels, out_channels),
        "bf": jnp.zeros((1, out_channels), jnp.float32),
    }


# ------------------------------------ main ---------------------------------------

if __name__ == "__main__":
    key = jax.random.PRNGKey(0)
    k_x, k_p, _ = jax.random.split(key, 3)

    num_nodes = 16
    in_channels, hidden_channels, out_channels = 8, 32, 4

    x = jax.random.normal(k_x, (num_nodes, in_channels), jnp.float32)

    # deterministic small edge list (src, dst) pairs
    src = jnp.array([0, 1, 2, 3, 4, 5, 6, 7, 8, 9, 10, 11, 12, 13, 14, 15,
                     0, 2, 4, 6], dtype=jnp.int32)
    dst = jnp.array([1, 2, 3, 4, 5, 6, 7, 8, 9, 10, 11, 12, 13, 14, 15, 0,
                     8, 10, 12, 14], dtype=jnp.int32)
    edge_index = (src, dst)

    n_pad = padded_num_nodes(num_nodes)
    a_hat_p = build_normalized_adjacency(edge_index, num_nodes, n_pad)
    params = init_params(k_p, in_channels, hidden_channels, out_channels)

    out = gcn_forward(a_hat_p, x, params, num_nodes)
    jax.block_until_ready(out)
    assert out.shape == (num_nodes, out_channels)
    print("KERNEL_OK")
</pallas_src>

<mosaic_0001>
module attributes {stable_mosaic.version = 11 : i64} {
  func.func @transform_kernel(%arg0: i32, %arg1: memref<128x128xbf16, #tpu.memory_space<vmem>>, %arg2: memref<128x128xbf16, #tpu.memory_space<vmem>>, %arg3: memref<128x128xbf16, #tpu.memory_space<vmem>>) attributes {dimension_semantics = [#tpu.dimension_semantics<parallel>], iteration_bounds = array<i64: 1>, scalar_prefetch = 0 : i64, scratch_operands = 0 : i64, tpu.core_type = #tpu.core_type<tc>, window_params = [{transform_indices = @transform_0, window_bounds = array<i64: 128, 128>}, {pipeline_mode = #tpu.pipeline_mode<synchronous>, transform_indices = @transform_1, window_bounds = array<i64: 128, 128>}, {transform_indices = @transform_2, window_bounds = array<i64: 128, 128>}]} {
    %c0 = arith.constant 0 : index
    %c0_0 = arith.constant 0 : index
    %0 = vector.load %arg1[%c0, %c0_0] : memref<128x128xbf16, #tpu.memory_space<vmem>>, vector<128x128xbf16>
    %c0_1 = arith.constant 0 : index
    %c0_2 = arith.constant 0 : index
    %1 = vector.load %arg2[%c0_1, %c0_2] : memref<128x128xbf16, #tpu.memory_space<vmem>>, vector<128x128xbf16>
    %cst = arith.constant dense<0.000000e+00> : vector<128x128xf32>
    %2 = tpu.matmul %0, %1, %cst {dimension_numbers = #tpu.dot_dimension_numbers<[1], [0], [0], [1], [0, 0, 1, 1], [], []>} : vector<128x128xbf16>, vector<128x128xbf16>, vector<128x128xf32> -> vector<128x128xf32>
    %3 = arith.truncf %2 : vector<128x128xf32> to vector<128x128xbf16>
    %c0_3 = arith.constant 0 : index
    %c0_4 = arith.constant 0 : index
    %4 = vector.load %arg3[%c0_3, %c0_4] : memref<128x128xbf16, #tpu.memory_space<vmem>>, vector<128x128xbf16>
    tpu.vector_store %arg3[%c0_3, %c0_4], %3 {strides = array<i32>} : memref<128x128xbf16, #tpu.memory_space<vmem>>, vector<128x128xbf16>,
    return
  }
  func.func @transform_0(%arg0: i32) -> (i32, i32) {
    %c0_i32 = arith.constant 0 : i32
    %c0_i32_0 = arith.constant 0 : i32
    return %arg0, %c0_i32 : i32, i32
  }
  func.func @transform_1(%arg0: i32) -> (i32, i32) {
    %c0_i32 = arith.constant 0 : i32
    %c0_i32_0 = arith.constant 0 : i32
    %c0_i32_1 = arith.constant 0 : i32
    return %c0_i32, %c0_i32_0 : i32, i32
  }
  func.func @transform_2(%arg0: i32) -> (i32, i32) {
    %c0_i32 = arith.constant 0 : i32
    %c0_i32_0 = arith.constant 0 : i32
    return %arg0, %c0_i32 : i32, i32
  }
}

</mosaic_0001>

<llo_original>
// kernel: tpu_custom_call.1
$region0: #{tpu_custom_call.1}
  #allocation0 [shape = 'u32[]', space=smem, size = 0x4, offset = 0x4, fixed_abs, tag = 'smem constant byte address 0x4 - core index']
  #allocation1 [shape = 'u32[144,128]{1,0:T(1,128)}', space=vmem, size = 0x12000, scoped, tag = 'internal scratch']
  %s0 = inlined_call_operand.hbm [shape: bf16[128,128], index: 0, kind: input, shape index: {}]
  %s1 = inlined_call_operand.hbm [shape: bf16[128,128], index: 1, kind: input, shape index: {}]
  %s2 = inlined_call_operand.hbm [shape: bf16[128,128], index: 2, kind: output, shape index: {}]
  %s3 = sld [smem:[#allocation0]]
  $region26: #{tpu_custom_call.1} parent=0
    _
  %s5 = ssub.s32 1, %s3
  %s6 = scalar_select 0, %s5, %s3
  $region1: #{tpu_custom_call.1} parent=0
    #allocation2 [shape = 'u8[32768]{0}', space=vmem, size = 0x8000, scoped, tag = 'input window, operand 0, single buffered']
    #allocation3 [shape = 's32[1]{0}', space=sflag, size = 0x4, scoped, tag = 'scoped memory for tpu_custom_call.1']
    #allocation4 [shape = 's32[1]{0}', space=sflag, size = 0x4, scoped, tag = 'scoped memory for tpu_custom_call.1']
    #allocation5 [shape = 'u8[32768]{0}', space=vmem, size = 0x8000, scoped, tag = 'input window, operand 1, single buffered']
    #allocation6 [shape = 's32[1]{0}', space=sflag, size = 0x4, scoped, tag = 'scoped memory for tpu_custom_call.1']
    #allocation7 [shape = 'u8[32768]{0}', space=vmem, size = 0x8000, scoped, tag = 'output window, operand 0, single buffered']
    %7 = vsyncpa [#allocation3], 0
    %8 = vsyncpa [#allocation6], 0
    %9 = vsyncpa [#allocation4], 0
    // Predicated region
    $region2: #{tpu_custom_call.1} parent=1 // pred_check
      _
    $region3: #{tpu_custom_call.1} parent=1 // pred_check_branch
      %11 = sbr.rel (0) target = $region5
    $region4: #{tpu_custom_call.1} parent=1 // pred_region
      %s13 = ssub.s32 1024, 1024
      %14 = vsyncadd [#allocation3], %s13
      %s15 = sshll.u32 [#allocation2], 4
      %s16 = int_to_ptr.vmem [resolvable:$true] %s15
      %21 = dma.hbm_to_vmem [thread:$0]  %s0, 1024, %s16, [#allocation3], 64, 64, 4
    $region5: #{tpu_custom_call.1} parent=1 // pred_fallthru
      _
    // Predicated region
    $region6: #{tpu_custom_call.1} parent=1 // pred_check
      _
    $region7: #{tpu_custom_call.1} parent=1 // pred_check_branch
      %23 = sbr.rel (0) target = $region9
    $region8: #{tpu_custom_call.1} parent=1 // pred_region
      %s25 = ssub.s32 1024, 1024
      %26 = vsyncadd [#allocation6], %s25
      %s27 = sshll.u32 [#allocation5], 4
      %s28 = int_to_ptr.vmem [resolvable:$true] %s27
      %33 = dma.hbm_to_vmem [thread:$0]  %s1, 1024, %s28, [#allocation6], 64, 64, 4
    $region9: #{tpu_custom_call.1} parent=1 // pred_fallthru
      _
    // Predicated region
    $region10: #{tpu_custom_call.1} parent=1 // pred_check
      _
    $region11: #{tpu_custom_call.1} parent=1 // pred_check_branch
      %35 = sbr.rel (0) target = $region13
    $region12: #{tpu_custom_call.1} parent=1 // pred_region
      %36 = dma.done [#allocation3], 1024
    $region13: #{tpu_custom_call.1} parent=1 // pred_fallthru
      _
    // Predicated region
    $region14: #{tpu_custom_call.1} parent=1 // pred_check
      _
    $region15: #{tpu_custom_call.1} parent=1 // pred_check_branch
      %38 = sbr.rel (0) target = $region17
    $region16: #{tpu_custom_call.1} parent=1 // pred_region
      %39 = dma.done [#allocation6], 1024
    $region17: #{tpu_custom_call.1} parent=1 // pred_fallthru
      _
    %v41 = vld [vmem:[#allocation2] sm:$0xf]
    %v42 = vld [vmem:[#allocation2 + $0x4] sm:$0xf]
    %v43 = vld [vmem:[#allocation2 + $0x8] sm:$0xf]
    %v44 = vld [vmem:[#allocation2 + $0xc] sm:$0xf]
    %v45 = vld [vmem:[#allocation2 + $0x10] sm:$0xf]
    %v46 = vld [vmem:[#allocation2 + $0x14] sm:$0xf]
    %v47 = vld [vmem:[#allocation2 + $0x18] sm:$0xf]
    %v48 = vld [vmem:[#allocation2 + $0x1c] sm:$0xf]
    %v49 = vld [vmem:[#allocation2 + $0x20] sm:$0xf]
    %v50 = vld [vmem:[#allocation2 + $0x24] sm:$0xf]
    %v51 = vld [vmem:[#allocation2 + $0x28] sm:$0xf]
    %v52 = vld [vmem:[#allocation2 + $0x2c] sm:$0xf]
    %v53 = vld [vmem:[#allocation2 + $0x30] sm:$0xf]
    %v54 = vld [vmem:[#allocation2 + $0x34] sm:$0xf]
    %v55 = vld [vmem:[#allocation2 + $0x38] sm:$0xf]
    %v56 = vld [vmem:[#allocation2 + $0x3c] sm:$0xf]
    %v57 = vld [vmem:[#allocation5] sm:$0xf]
    %v58 = vld [vmem:[#allocation5 + $0x4] sm:$0xf]
    %v59 = vld [vmem:[#allocation5 + $0x8] sm:$0xf]
    %v60 = vld [vmem:[#allocation5 + $0xc] sm:$0xf]
    %v61 = vld [vmem:[#allocation5 + $0x10] sm:$0xf]
    %v62 = vld [vmem:[#allocation5 + $0x14] sm:$0xf]
    %v63 = vld [vmem:[#allocation5 + $0x18] sm:$0xf]
    %v64 = vld [vmem:[#allocation5 + $0x1c] sm:$0xf]
    %v65 = vld [vmem:[#allocation5 + $0x20] sm:$0xf]
    %v66 = vld [vmem:[#allocation5 + $0x24] sm:$0xf]
    %v67 = vld [vmem:[#allocation5 + $0x28] sm:$0xf]
    %v68 = vld [vmem:[#allocation5 + $0x2c] sm:$0xf]
    %v69 = vld [vmem:[#allocation5 + $0x30] sm:$0xf]
    %v70 = vld [vmem:[#allocation5 + $0x34] sm:$0xf]
    %v71 = vld [vmem:[#allocation5 + $0x38] sm:$0xf]
    %v72 = vld [vmem:[#allocation5 + $0x3c] sm:$0xf]
    %v89 = vunpack.c.l.b16 %v41
    %v90 = vunpack.c.l.b16 %v42
    %v91 = vunpack.c.l.b16 %v43
    %v92 = vunpack.c.l.b16 %v44
    %v93 = vunpack.c.l.b16 %v45
    %v94 = vunpack.c.l.b16 %v46
    %v95 = vunpack.c.l.b16 %v47
    %v96 = vunpack.c.l.b16 %v48
    %v97 = vunpack.c.l.b16 %v49
    %v98 = vunpack.c.l.b16 %v50
    %v99 = vunpack.c.l.b16 %v51
    %v100 = vunpack.c.l.b16 %v52
    %v101 = vunpack.c.l.b16 %v53
    %v102 = vunpack.c.l.b16 %v54
    %v103 = vunpack.c.l.b16 %v55
    %v104 = vunpack.c.l.b16 %v56
    %v105 = vpack.c.b16 %v90, %v89
    %v106 = vpack.c.b16 %v92, %v91
    %v107 = vpack.c.b16 %v94, %v93
    %v108 = vpack.c.b16 %v96, %v95
    %v109 = vpack.c.b16 %v98, %v97
    %v110 = vpack.c.b16 %v100, %v99
    %v111 = vpack.c.b16 %v102, %v101
    %v112 = vpack.c.b16 %v104, %v103
    %v137 = vunpack.c.l.b16 %v57
    %v138 = vunpack.c.l.b16 %v58
    %v139 = vunpack.c.l.b16 %v59
    %v140 = vunpack.c.l.b16 %v60
    %v141 = vunpack.c.l.b16 %v61
    %v142 = vunpack.c.l.b16 %v62
    %v143 = vunpack.c.l.b16 %v63
    %v144 = vunpack.c.l.b16 %v64
    %v145 = vunpack.c.l.b16 %v65
    %v146 = vunpack.c.l.b16 %v66
    %v147 = vunpack.c.l.b16 %v67
    %v148 = vunpack.c.l.b16 %v68
    %v149 = vunpack.c.l.b16 %v69
    %v150 = vunpack.c.l.b16 %v70
    %v151 = vunpack.c.l.b16 %v71
    %v152 = vunpack.c.l.b16 %v72
    %v153 = vpack.c.b16 %v138, %v137
    %v154 = vpack.c.b16 %v140, %v139
    %v155 = vpack.c.b16 %v142, %v141
    %v156 = vpack.c.b16 %v144, %v143
    %v157 = vpack.c.b16 %v146, %v145
    %v158 = vpack.c.b16 %v148, %v147
    %v159 = vpack.c.b16 %v150, %v149
    %v160 = vpack.c.b16 %v152, %v151
    %169 = vmatprep.subr.bf16.mxu0 0
    %170 = vmatpush1.bf16.msra.mxu0 %v153
    %171 = vmatprep.subr.bf16.mxu0 0
    %172 = vmatpush1.bf16.msra.mxu0 %v154
    %173 = vmatprep.subr.bf16.mxu0 0
    %174 = vmatpush1.bf16.msra.mxu0 %v155
    %175 = vmatprep.subr.bf16.mxu0 0
    %176 = vmatpush1.bf16.msra.mxu0 %v156
    %177 = vmatprep.subr.bf16.mxu0 0
    %178 = vmatpush1.bf16.msra.mxu0 %v157
    %179 = vmatprep.subr.bf16.mxu0 0
    %180 = vmatpush1.bf16.msra.mxu0 %v158
    %181 = vmatprep.subr.bf16.mxu0 0
    %182 = vmatpush1.bf16.msra.mxu0 %v159
    %183 = vmatprep.subr.bf16.mxu0 0
    %184 = vmatpush1.bf16.msra.mxu0 %v160
    %185 = vmatprep.subr.bf16.mxu0 0
    %186 = vmatpush1.bf16.msra.mxu0 0
    %187 = vmatprep.subr.bf16.mxu0 0
    %188 = vmatpush1.bf16.msra.mxu0 0
    %189 = vmatprep.subr.bf16.mxu0 0
    %190 = vmatpush1.bf16.msra.mxu0 0
    %191 = vmatprep.subr.bf16.mxu0 0
    %192 = vmatpush1.bf16.msra.mxu0 0
    %193 = vmatprep.subr.bf16.mxu0 0
    %194 = vmatpush1.bf16.msra.mxu0 0
    %195 = vmatprep.subr.bf16.mxu0 0
    %196 = vmatpush1.bf16.msra.mxu0 0
    %197 = vmatprep.subr.bf16.mxu0 0
    %198 = vmatpush1.bf16.msra.mxu0 0
    %199 = vmatprep.subr.bf16.mxu0 0
    %200 = vmatpush1.bf16.msra.mxu0 0
    %201 = vmatprep.mubr.bf16.mxu0 0
    %202 = vmatmul.mubr.bf16.gmra.mrb[0].mxu0 %v105
    %v203 = vpop.f32.mrb[0].mxu0
    %v204 = vadd.f32 0.0, %v203
    %v205 = vpop.f32.mrb[0].mxu0
    %v206 = vpop.f32.mrb[0].mxu0
    %v207 = vadd.f32 0.0, %v206
    %v208 = vpop.f32.mrb[0].mxu0
    %209 = vmatprep.mubr.bf16.mxu0 0
    %210 = vmatmul.mubr.bf16.gmra.mrb[0].mxu0 %v106
    %v211 = vpop.f32.mrb[0].mxu0
    %v212 = vadd.f32 0.0, %v211
    %v213 = vpop.f32.mrb[0].mxu0
    %v214 = vpop.f32.mrb[0].mxu0
    %v215 = vadd.f32 0.0, %v214
    %v216 = vpop.f32.mrb[0].mxu0
    %217 = vmatprep.mubr.bf16.mxu0 0
    %218 = vmatmul.mubr.bf16.gmra.mrb[0].mxu0 %v107
    %v219 = vpop.f32.mrb[0].mxu0
    %v220 = vadd.f32 0.0, %v219
    %v221 = vpop.f32.mrb[0].mxu0
    %v222 = vpop.f32.mrb[0].mxu0
    %v223 = vadd.f32 0.0, %v222
    %v224 = vpop.f32.mrb[0].mxu0
    %225 = vmatprep.mubr.bf16.mxu0 0
    %226 = vmatmul.mubr.bf16.gmra.mrb[0].mxu0 %v108
    %v227 = vpop.f32.mrb[0].mxu0
    %v228 = vadd.f32 0.0, %v227
    %v229 = vpop.f32.mrb[0].mxu0
    %v230 = vpop.f32.mrb[0].mxu0
    %v231 = vadd.f32 0.0, %v230
    %v232 = vpop.f32.mrb[0].mxu0
    %233 = vmatprep.mubr.bf16.mxu0 0
    %234 = vmatmul.mubr.bf16.gmra.mrb[0].mxu0 %v109
    %v235 = vpop.f32.mrb[0].mxu0
    %v236 = vadd.f32 0.0, %v235
    %v237 = vpop.f32.mrb[0].mxu0
    %v238 = vpop.f32.mrb[0].mxu0
    %v239 = vadd.f32 0.0, %v238
    %v240 = vpop.f32.mrb[0].mxu0
    %241 = vmatprep.mubr.bf16.mxu0 0
    %242 = vmatmul.mubr.bf16.gmra.mrb[0].mxu0 %v110
    %v243 = vpop.f32.mrb[0].mxu0
    %v244 = vadd.f32 0.0, %v243
    %v245 = vpop.f32.mrb[0].mxu0
    %v246 = vpop.f32.mrb[0].mxu0
    %v247 = vadd.f32 0.0, %v246
    %v248 = vpop.f32.mrb[0].mxu0
    %249 = vmatprep.mubr.bf16.mxu0 0
    %250 = vmatmul.mubr.bf16.gmra.mrb[0].mxu0 %v111
    %v251 = vpop.f32.mrb[0].mxu0
    %v252 = vadd.f32 0.0, %v251
    %v253 = vpop.f32.mrb[0].mxu0
    %v254 = vpop.f32.mrb[0].mxu0
    %v255 = vadd.f32 0.0, %v254
    %v256 = vpop.f32.mrb[0].mxu0
    %257 = vmatprep.mubr.bf16.mxu0 0
    %258 = vmatmul.mubr.bf16.gmra.mrb[0].mxu0 %v112
    %v259 = vpop.f32.mrb[0].mxu0
    %v260 = vadd.f32 0.0, %v259
    %v261 = vpop.f32.mrb[0].mxu0
    %v262 = vpop.f32.mrb[0].mxu0
    %v263 = vadd.f32 0.0, %v262
    %v264 = vpop.f32.mrb[0].mxu0
    %265 = vdwg.mxu0
    %v266 = vpack.c.bf16 %v207, %v204
    %v267 = vpack.c.bf16 %v215, %v212
    %v268 = vpack.c.bf16 %v223, %v220
    %v269 = vpack.c.bf16 %v231, %v228
    %v270 = vpack.c.bf16 %v239, %v236
    %v271 = vpack.c.bf16 %v247, %v244
    %v272 = vpack.c.bf16 %v255, %v252
    %v273 = vpack.c.bf16 %v263, %v260
    %v282 = vunpack.c.l.b16 %v266
    %v283 = vunpack.c.h.b16 %v266
    %v284 = vunpack.c.l.b16 %v267
    %v285 = vunpack.c.h.b16 %v267
    %v286 = vunpack.c.l.b16 %v268
    %v287 = vunpack.c.h.b16 %v268
    %v288 = vunpack.c.l.b16 %v269
    %v289 = vunpack.c.h.b16 %v269
    %v290 = vunpack.c.l.b16 %v270
    %v291 = vunpack.c.h.b16 %v270
    %v292 = vunpack.c.l.b16 %v271
    %v293 = vunpack.c.h.b16 %v271
    %v294 = vunpack.c.l.b16 %v272
    %v295 = vunpack.c.h.b16 %v272
    %v296 = vunpack.c.l.b16 %v273
    %v297 = vunpack.c.h.b16 %v273
    %v298 = vpack.c.b16 %v282, %v282
    %v299 = vpack.c.b16 %v283, %v283
    %v300 = vpack.c.b16 %v284, %v284
    %v301 = vpack.c.b16 %v285, %v285
    %v302 = vpack.c.b16 %v286, %v286
    %v303 = vpack.c.b16 %v287, %v287
    %v304 = vpack.c.b16 %v288, %v288
    %v305 = vpack.c.b16 %v289, %v289
    %v306 = vpack.c.b16 %v290, %v290
    %v307 = vpack.c.b16 %v291, %v291
    %v308 = vpack.c.b16 %v292, %v292
    %v309 = vpack.c.b16 %v293, %v293
    %v310 = vpack.c.b16 %v294, %v294
    %v311 = vpack.c.b16 %v295, %v295
    %v312 = vpack.c.b16 %v296, %v296
    %v313 = vpack.c.b16 %v297, %v297
    %330 = vst [vmem:[#allocation7] sm:$0xf] %v298
    %331 = vst [vmem:[#allocation7 + $0x4] sm:$0xf] %v299
    %332 = vst [vmem:[#allocation7 + $0x8] sm:$0xf] %v300
    %333 = vst [vmem:[#allocation7 + $0xc] sm:$0xf] %v301
    %334 = vst [vmem:[#allocation7 + $0x10] sm:$0xf] %v302
    %335 = vst [vmem:[#allocation7 + $0x14] sm:$0xf] %v303
    %336 = vst [vmem:[#allocation7 + $0x18] sm:$0xf] %v304
    %337 = vst [vmem:[#allocation7 + $0x1c] sm:$0xf] %v305
    %338 = vst [vmem:[#allocation7 + $0x20] sm:$0xf] %v306
    %339 = vst [vmem:[#allocation7 + $0x24] sm:$0xf] %v307
    %340 = vst [vmem:[#allocation7 + $0x28] sm:$0xf] %v308
    %341 = vst [vmem:[#allocation7 + $0x2c] sm:$0xf] %v309
    %342 = vst [vmem:[#allocation7 + $0x30] sm:$0xf] %v310
    %343 = vst [vmem:[#allocation7 + $0x34] sm:$0xf] %v311
    %344 = vst [vmem:[#allocation7 + $0x38] sm:$0xf] %v312
    %345 = vst [vmem:[#allocation7 + $0x3c] sm:$0xf] %v313
    // Predicated region
    $region18: #{tpu_custom_call.1} parent=1 // pred_check
      _
    $region19: #{tpu_custom_call.1} parent=1 // pred_check_branch
      %347 = sbr.rel (0) target = $region21
    $region20: #{tpu_custom_call.1} parent=1 // pred_region
      %s349 = ssub.s32 1024, 1024
      %350 = vsyncadd [#allocation4], %s349
      %s351 = sshll.u32 [#allocation7], 4
      %s352 = int_to_ptr.vmem [resolvable:$true] %s351
      %357 = dma.vmem_to_hbm [thread:$0]  %s352, 1024, %s2, [#allocation4], 64, 64, 4
    $region21: #{tpu_custom_call.1} parent=1 // pred_fallthru
      _
    // Predicated region
    $region22: #{tpu_custom_call.1} parent=1 // pred_check
      _
    $region23: #{tpu_custom_call.1} parent=1 // pred_check_branch
      %359 = sbr.rel (0) target = $region25
    $region24: #{tpu_custom_call.1} parent=1 // pred_region
      %360 = dma.done [#allocation4], 1024
    $region25: #{tpu_custom_call.1} parent=1 // pred_fallthru
      _
    %361 = vsyncpa [#allocation3], 1
    %362 = vsyncpa [#allocation6], 1
    %363 = vsyncpa [#allocation4], 1

</llo_original>
